<compile_context>
chip_gen: v7x
topology: tpu7x:2x2x1
jax: 0.10.0
libtpu: 0.0.40
codegen_flags: <defaults>
</compile_context>

<pallas_src>
import jax
import jax.numpy as jnp
from jax.experimental import pallas as pl
from jax.experimental.pallas import tpu as pltpu
import numpy as np

# ---- module constants (defaults of DyReLU.__init__) ----
LAMBDA_A = 1.0 * 2.0      # self.lambda_a = lambda_a * 2
INIT_A0, INIT_A1 = 1.0, 0.0
INIT_B0, INIT_B1 = 0.0, 0.0


def dyrelu_tile_kernel(x_ref, coef_ref, o_ref):
    """Elementwise DyReLU on one (t_n, t_hw) tile of the flattened (B*C, HW) input.

    x_ref:    (t_n, t_hw)  input tile, native dtype
    coef_ref: (t_n, 4)     per-(batch,channel) [a1, b1, a2, b2] coefficients, f32
    o_ref:    (t_n, t_hw)  output tile
    """
    x = x_ref[...]                        # native dtype
    c = coef_ref[...]                     # (t_n, 4) f32
    a1 = c[:, 0:1]                        # (t_n, 1) -> broadcast over lanes
    b1 = c[:, 1:2]
    a2 = c[:, 2:3]
    b2 = c[:, 3:4]
    o_ref[...] = jnp.maximum(x * a1 + b1, x * a2 + b2).astype(o_ref.dtype)


def dyrelu_pallas(x, w1, b1, w2, b2):
    """x: (B, C, H, W) (NCHW). Returns (B, C, H, W)."""
    B, C, H, W = x.shape
    HW = H * W
    N = B * C
    S = w1.shape[0]

    # ---------------- gate path (tiny, hoisted out of the kernel) ------------
    # TODO(synk): optionally fuse the global-average-pool into the Pallas kernel
    # (per-image grid) to read x from HBM only once when a (C, HW) slab fits VMEM.
    xf = x.reshape(B, C, HW)
    pooled = jnp.mean(xf, axis=-1, dtype=jnp.float32)                   # (B, C)
    h = jax.nn.relu(pooled @ w1.astype(jnp.float32).T
                    + b1.astype(jnp.float32).reshape(1, S))             # (B, S)
    y = h @ w2.astype(jnp.float32).T + b2.astype(jnp.float32).reshape(1, 4 * C)
    y = jnp.clip(y + 3.0, 0.0, 6.0) * (1.0 / 6.0)                       # h_sigmoid

    a1 = (y[:, 0 * C:1 * C] - 0.5) * LAMBDA_A + INIT_A0
    bb1 = y[:, 1 * C:2 * C] - 0.5 + INIT_B0
    a2 = (y[:, 2 * C:3 * C] - 0.5) * LAMBDA_A + INIT_A1
    bb2 = y[:, 3 * C:4 * C] - 0.5 + INIT_B1
    # (B*C, 4): row index matches the flattened (B*C, HW) layout of x; kept f32.
    coef = jnp.stack([a1, bb1, a2, bb2], axis=-1).reshape(N, 4)

    # ---------------- tiling for the elementwise kernel ----------------------
    x2 = x.reshape(N, HW)                                  # free reshape (NCHW)
    itemsize = jnp.dtype(x.dtype).itemsize
    sub_mult = {4: 8, 2: 16, 1: 32}.get(itemsize, 8)       # sublane packing
    target_bytes = 1 << 20                                 # ~1 MiB per block

    # Lane (last) dim: multiple of 128, or the full HW (both satisfy layout rules).
    max_lanes = max(128, (target_bytes // (sub_mult * itemsize)) // 128 * 128)
    t_hw = HW if HW <= max_lanes else max_lanes
    n_hw = pl.cdiv(HW, t_hw)

    # Sublane dim: fill up to the byte target, multiple of sub_mult, or full N.
    t_n = max(sub_mult, (target_bytes // (t_hw * itemsize)) // sub_mult * sub_mult)
    if t_n >= N:
        t_n = N
    n_n = pl.cdiv(N, t_n)

    block_bytes = t_n * t_hw * itemsize
    coef_bytes = ((t_n + 7) // 8 * 8) * 128 * 4            # padded vreg layout
    vmem_limit = int(min(32 << 20,                          # safe on v7x (64 MiB phys)
                         max(8 << 20,
                             4 * block_bytes + 2 * coef_bytes + (2 << 20))))

    out = pl.pallas_call(
        dyrelu_tile_kernel,
        out_shape=jax.ShapeDtypeStruct((N, HW), x.dtype),
        grid_spec=pltpu.PrefetchScalarGridSpec(
            num_scalar_prefetch=0,
            grid=(n_n, n_hw),                              # non-divisible OK: masked
            in_specs=[
                pl.BlockSpec((t_n, t_hw), lambda i, j: (i, j)),   # x tile
                pl.BlockSpec((t_n, 4), lambda i, j: (i, 0)),      # coefficients
            ],
            out_specs=pl.BlockSpec((t_n, t_hw), lambda i, j: (i, j)),
        ),
        compiler_params=pltpu.CompilerParams(
            dimension_semantics=("parallel", "parallel"),
            vmem_limit_bytes=vmem_limit),
    )(x2, coef)

    return out.reshape(B, C, H, W)


def dyrelu_reference(x, w1, b1, w2, b2):
    """Pure-JAX reference mirroring the PyTorch forward."""
    B, C, H, W = x.shape
    y = jnp.mean(x, axis=(2, 3))                              # (B, C)
    h = jax.nn.relu(y @ w1.T + b1[:, 0])                      # (B, S)
    yy = h @ w2.T + b2[:, 0]                                  # (B, 4C)
    yy = jnp.clip(yy + 3.0, 0.0, 6.0) / 6.0
    a1 = ((yy[:, 0 * C:1 * C] - 0.5) * LAMBDA_A + INIT_A0)[:, :, None, None]
    bb1 = (yy[:, 1 * C:2 * C] - 0.5 + INIT_B0)[:, :, None, None]
    a2 = ((yy[:, 2 * C:3 * C] - 0.5) * LAMBDA_A + INIT_A1)[:, :, None, None]
    bb2 = (yy[:, 3 * C:4 * C] - 0.5 + INIT_B1)[:, :, None, None]
    return jnp.maximum(x * a1 + bb1, x * a2 + bb2)


if __name__ == "__main__":
    # small shapes consistent with the module: inp(=C)=16, reduction=4 -> squeeze=4
    B, C, H, W = 2, 16, 16, 16
    S = C // 4                      # squeeze (reduction == 4 path)
    EXP = 4                         # K2=True, use_bias=True

    key = jax.random.PRNGKey(0)
    kx, k1, k2, k3, k4 = jax.random.split(key, 5)

    x = jax.random.normal(kx, (B, C, H, W), dtype=jnp.float32)
    # nn.Linear shapes: (out, in) weight, (out,) bias (carried here as (out, 1))
    w1 = jax.random.normal(k1, (S, C), dtype=jnp.float32) * 0.2
    b1 = jax.random.normal(k2, (S, 1), dtype=jnp.float32) * 0.2
    w2 = jax.random.normal(k3, (EXP * C, S), dtype=jnp.float32) * 0.2
    b2 = jax.random.normal(k4, (EXP * C, 1), dtype=jnp.float32) * 0.2

    fn = jax.jit(dyrelu_pallas)
    out = jax.block_until_ready(fn(x, w1, b1, w2, b2))

    ref = jax.block_until_ready(dyrelu_reference(x, w1, b1, w2, b2))
    np.testing.assert_allclose(np.asarray(out), np.asarray(ref),
                               rtol=1e-5, atol=1e-5)

    # TODO(synk): use_spatial=True branch (1x1 conv + BN + softmax gate) not exercised
    # by the default config and therefore not implemented.

    print("KERNEL_OK")
</pallas_src>

<mosaic_0001>
module attributes {stable_mosaic.version = 11 : i64} {
  func.func @dyrelu_tile_kernel(%arg0: i32, %arg1: i32, %arg2: memref<32x256xf32, #tpu.memory_space<vmem>>, %arg3: memref<32x4xf32, #tpu.memory_space<vmem>>, %arg4: memref<32x256xf32, #tpu.memory_space<vmem>>) attributes {dimension_semantics = [#tpu.dimension_semantics<parallel>, #tpu.dimension_semantics<parallel>], iteration_bounds = array<i64: 1, 1>, scalar_prefetch = 0 : i64, scratch_operands = 0 : i64, tpu.core_type = #tpu.core_type<tc>, window_params = [{transform_indices = @transform_0, window_bounds = array<i64: 32, 256>}, {transform_indices = @transform_1, window_bounds = array<i64: 32, 4>}, {transform_indices = @transform_2, window_bounds = array<i64: 32, 256>}]} {
    %c0 = arith.constant 0 : index
    %c0_0 = arith.constant 0 : index
    %0 = vector.load %arg2[%c0, %c0_0] : memref<32x256xf32, #tpu.memory_space<vmem>>, vector<32x256xf32>
    %c0_1 = arith.constant 0 : index
    %c0_2 = arith.constant 0 : index
    %1 = vector.load %arg3[%c0_1, %c0_2] : memref<32x4xf32, #tpu.memory_space<vmem>>, vector<32x4xf32>
    %2 = vector.extract_strided_slice %1 {offsets = [0, 0], sizes = [32, 1], strides = [1, 1]} : vector<32x4xf32> to vector<32x1xf32>
    %3 = vector.extract_strided_slice %1 {offsets = [0, 1], sizes = [32, 1], strides = [1, 1]} : vector<32x4xf32> to vector<32x1xf32>
    %4 = vector.extract_strided_slice %1 {offsets = [0, 2], sizes = [32, 1], strides = [1, 1]} : vector<32x4xf32> to vector<32x1xf32>
    %5 = vector.extract_strided_slice %1 {offsets = [0, 3], sizes = [32, 1], strides = [1, 1]} : vector<32x4xf32> to vector<32x1xf32>
    %6 = vector.broadcast %2 : vector<32x1xf32> to vector<32x256xf32>
    %7 = arith.mulf %0, %6 : vector<32x256xf32>
    %8 = vector.broadcast %3 : vector<32x1xf32> to vector<32x256xf32>
    %9 = arith.addf %7, %8 : vector<32x256xf32>
    %10 = vector.broadcast %4 : vector<32x1xf32> to vector<32x256xf32>
    %11 = arith.mulf %0, %10 : vector<32x256xf32>
    %12 = vector.broadcast %5 : vector<32x1xf32> to vector<32x256xf32>
    %13 = arith.addf %11, %12 : vector<32x256xf32>
    %14 = arith.maximumf %9, %13 : vector<32x256xf32>
    %c0_3 = arith.constant 0 : index
    %c0_4 = arith.constant 0 : index
    %15 = vector.load %arg4[%c0_3, %c0_4] : memref<32x256xf32, #tpu.memory_space<vmem>>, vector<32x256xf32>
    tpu.vector_store %arg4[%c0_3, %c0_4], %14 {strides = array<i32>} : memref<32x256xf32, #tpu.memory_space<vmem>>, vector<32x256xf32>,
    return
  }
  func.func @transform_0(%arg0: i32, %arg1: i32) -> (i32, i32) {
    %c0_i32 = arith.constant 0 : i32
    return %arg0, %arg1 : i32, i32
  }
  func.func @transform_1(%arg0: i32, %arg1: i32) -> (i32, i32) {
    %c0_i32 = arith.constant 0 : i32
    %c0_i32_0 = arith.constant 0 : i32
    return %arg0, %c0_i32 : i32, i32
  }
  func.func @transform_2(%arg0: i32, %arg1: i32) -> (i32, i32) {
    %c0_i32 = arith.constant 0 : i32
    return %arg0, %arg1 : i32, i32
  }
}

</mosaic_0001>

<llo_original>
// kernel: dyrelu_pallas.1
$region0: #{dyrelu_pallas.1}
  #allocation0 [shape = 'u32[]', space=smem, size = 0x4, offset = 0x4, fixed_abs, tag = 'smem constant byte address 0x4 - core index']
  #allocation1 [shape = 'u32[144,128]{1,0:T(1,128)}', space=vmem, size = 0x12000, scoped, tag = 'internal scratch']
  %s0 = inlined_call_operand.vmem [shape: f32[32,256], index: 0, kind: input, shape index: {}]
  %s1 = inlined_call_operand.vmem [shape: f32[32,4], index: 1, kind: input, shape index: {}]
  %s2 = inlined_call_operand.vmem [shape: f32[32,256], index: 2, kind: output, shape index: {}]
  %s3 = sld [smem:[#allocation0]]
  $region18: #{dyrelu_pallas.1} parent=0
    _
  %s5 = ssub.s32 1, %s3
  %s6 = scalar_select 0, %s5, %s3
  // Predicated region
  $region2: #{dyrelu_pallas.1} parent=0 // pred_check
    _
  $region3: #{dyrelu_pallas.1} parent=0 // pred_check_branch
    %8 = sbr.rel (0) target = $region5
  $region4: #{dyrelu_pallas.1} parent=0 // pred_region
    _
  $region5: #{dyrelu_pallas.1} parent=0 // pred_fallthru
    _
  // Predicated region
  $region6: #{dyrelu_pallas.1} parent=0 // pred_check
    _
  $region7: #{dyrelu_pallas.1} parent=0 // pred_check_branch
    %10 = sbr.rel (0) target = $region9
  $region8: #{dyrelu_pallas.1} parent=0 // pred_region
    _
  $region9: #{dyrelu_pallas.1} parent=0 // pred_fallthru
    _
  %v11 = vld [vmem:[%s0] sm:$0xff]
  %v12 = vld [vmem:[%s0 + $0x8] sm:$0xff]
  %v13 = vld [vmem:[%s0 + $0x10] sm:$0xff]
  %v14 = vld [vmem:[%s0 + $0x18] sm:$0xff]
  %v15 = vld [vmem:[%s0 + $0x20] sm:$0xff]
  %v16 = vld [vmem:[%s0 + $0x28] sm:$0xff]
  %v17 = vld [vmem:[%s0 + $0x30] sm:$0xff]
  %v18 = vld [vmem:[%s0 + $0x38] sm:$0xff]
  %v19 = vld [vmem:[%s1] sm:$0xff]
  %v20 = vld [vmem:[%s1 + $0x8] sm:$0xff]
  %v21 = vld [vmem:[%s1 + $0x10] sm:$0xff]
  %v22 = vld [vmem:[%s1 + $0x18] sm:$0xff]
  %24 = vset.pattern.permute.xlu0 0
  %25 = vperm.xlu0 %24, %v19
  %v26 = vpop.permute.xlu0 %25
  %29 = vset.pattern.permute.xlu0 0
  %30 = vperm.xlu0 %29, %v20
  %v31 = vpop.permute.xlu0 %30
  %34 = vset.pattern.permute.xlu0 0
  %35 = vperm.xlu0 %34, %v21
  %v36 = vpop.permute.xlu0 %35
  %39 = vset.pattern.permute.xlu0 0
  %40 = vperm.xlu0 %39, %v22
  %v41 = vpop.permute.xlu0 %40
  %v43 = vmul.f32 %v11, %v26
  %v44 = vmul.f32 %v12, %v26
  %v45 = vmul.f32 %v13, %v31
  %v46 = vmul.f32 %v14, %v31
  %v47 = vmul.f32 %v15, %v36
  %v48 = vmul.f32 %v16, %v36
  %v49 = vmul.f32 %v17, %v41
  %v50 = vmul.f32 %v18, %v41
  %51 = vset.pattern.permute.xlu0 1
  %52 = vperm.xlu0 %51, %v19
  %v53 = vpop.permute.xlu0 %52
  %55 = vset.pattern.permute.xlu0 1
  %56 = vperm.xlu0 %55, %v20
  %v57 = vpop.permute.xlu0 %56
  %59 = vset.pattern.permute.xlu0 1
  %60 = vperm.xlu0 %59, %v21
  %v61 = vpop.permute.xlu0 %60
  %63 = vset.pattern.permute.xlu0 1
  %64 = vperm.xlu0 %63, %v22
  %v65 = vpop.permute.xlu0 %64
  %v67 = vadd.f32 %v43, %v53
  %v68 = vadd.f32 %v44, %v53
  %v69 = vadd.f32 %v45, %v57
  %v70 = vadd.f32 %v46, %v57
  %v71 = vadd.f32 %v47, %v61
  %v72 = vadd.f32 %v48, %v61
  %v73 = vadd.f32 %v49, %v65
  %v74 = vadd.f32 %v50, %v65
  %75 = vset.pattern.permute.xlu0 2
  %76 = vperm.xlu0 %75, %v19
  %v77 = vpop.permute.xlu0 %76
  %79 = vset.pattern.permute.xlu0 2
  %80 = vperm.xlu0 %79, %v20
  %v81 = vpop.permute.xlu0 %80
  %83 = vset.pattern.permute.xlu0 2
  %84 = vperm.xlu0 %83, %v21
  %v85 = vpop.permute.xlu0 %84
  %87 = vset.pattern.permute.xlu0 2
  %88 = vperm.xlu0 %87, %v22
  %v89 = vpop.permute.xlu0 %88
  %v91 = vmul.f32 %v11, %v77
  %v92 = vmul.f32 %v12, %v77
  %v93 = vmul.f32 %v13, %v81
  %v94 = vmul.f32 %v14, %v81
  %v95 = vmul.f32 %v15, %v85
  %v96 = vmul.f32 %v16, %v85
  %v97 = vmul.f32 %v17, %v89
  %v98 = vmul.f32 %v18, %v89
  %99 = vset.pattern.permute.xlu0 3
  %100 = vperm.xlu0 %99, %v19
  %v101 = vpop.permute.xlu0 %100
  %103 = vset.pattern.permute.xlu0 3
  %104 = vperm.xlu0 %103, %v20
  %v105 = vpop.permute.xlu0 %104
  %107 = vset.pattern.permute.xlu0 3
  %108 = vperm.xlu0 %107, %v21
  %v109 = vpop.permute.xlu0 %108
  %111 = vset.pattern.permute.xlu0 3
  %112 = vperm.xlu0 %111, %v22
  %v113 = vpop.permute.xlu0 %112
  %v115 = vadd.f32 %v91, %v101
  %v116 = vadd.f32 %v92, %v101
  %v117 = vadd.f32 %v93, %v105
  %v118 = vadd.f32 %v94, %v105
  %v119 = vadd.f32 %v95, %v109
  %v120 = vadd.f32 %v96, %v109
  %v121 = vadd.f32 %v97, %v113
  %v122 = vadd.f32 %v98, %v113
  %v123 = vmax.f32 %v67, %v115
  %v124 = vmax.f32 %v68, %v116
  %v125 = vmax.f32 %v69, %v117
  %v126 = vmax.f32 %v70, %v118
  %v127 = vmax.f32 %v71, %v119
  %v128 = vmax.f32 %v72, %v120
  %v129 = vmax.f32 %v73, %v121
  %v130 = vmax.f32 %v74, %v122
  %131 = vst [vmem:[%s2] sm:$0xff] %v123
  %132 = vst [vmem:[%s2 + $0x8] sm:$0xff] %v124
  %133 = vst [vmem:[%s2 + $0x10] sm:$0xff] %v125
  %134 = vst [vmem:[%s2 + $0x18] sm:$0xff] %v126
  %135 = vst [vmem:[%s2 + $0x20] sm:$0xff] %v127
  %136 = vst [vmem:[%s2 + $0x28] sm:$0xff] %v128
  %137 = vst [vmem:[%s2 + $0x30] sm:$0xff] %v129
  %138 = vst [vmem:[%s2 + $0x38] sm:$0xff] %v130
  // Predicated region
  $region10: #{dyrelu_pallas.1} parent=0 // pred_check
    _
  $region11: #{dyrelu_pallas.1} parent=0 // pred_check_branch
    %140 = sbr.rel (0) target = $region13
  $region12: #{dyrelu_pallas.1} parent=0 // pred_region
    _
  $region13: #{dyrelu_pallas.1} parent=0 // pred_fallthru
    _
  // Predicated region
  $region14: #{dyrelu_pallas.1} parent=0 // pred_check
    _
  $region15: #{dyrelu_pallas.1} parent=0 // pred_check_branch
    %142 = sbr.rel (0) target = $region17
  $region16: #{dyrelu_pallas.1} parent=0 // pred_region
    _
  $region17: #{dyrelu_pallas.1} parent=0 // pred_fallthru
    _

</llo_original>
